<compile_context>
chip_gen: v6e
topology: v6e:2x2x1
jax: 0.10.0
libtpu: 0.0.40
codegen_flags: <defaults>
</compile_context>

<pallas_src>
import jax
import jax.numpy as jnp
from jax.experimental import pallas as pl
from jax.experimental.pallas import tpu as pltpu


def _round_up(n, m):
    return ((n + m - 1) // m) * m


def _residual_ff_kernel(x_ref, w1_ref, b1_ref, w2_ref, b2_ref, o_ref, acc_ref):
    # x_ref: (tm, D)   w1_ref: (D, tk)  b1_ref: (1, tk)
    # w2_ref: (tk, D)  b2_ref: (1, D)   o_ref: (tm, D)   acc_ref: (tm, D) f32
    k = pl.program_id(1)
    nk = pl.num_programs(1)

    @pl.when(k == 0)
    def _init():
        # Residual x and the second bias are added exactly once, at init.
        acc_ref[...] = (x_ref[...].astype(jnp.float32)
                        + b2_ref[...].astype(jnp.float32))

    # First matmul on native (e.g. bf16) operands, f32 accumulation on the MXU.
    h = jnp.dot(x_ref[...], w1_ref[...], preferred_element_type=jnp.float32)
    h = jnp.maximum(h + b1_ref[...].astype(jnp.float32), 0.0)      # bias + ReLU
    # Second matmul over this dff chunk; accumulate in f32.
    acc_ref[...] += jnp.dot(h.astype(w2_ref.dtype), w2_ref[...],
                            preferred_element_type=jnp.float32)

    @pl.when(k == nk - 1)
    def _finish():
        o_ref[...] = acc_ref[...].astype(o_ref.dtype)


def residual_feedforward(x, w1, b1, w2, b2, *, tm_max=512, tk_max=2048):
    """out = ReLU(x @ w1 + b1) @ w2 + b2 + x, with x: [B, S, D]."""
    B, S, D = x.shape
    dff = w1.shape[1]
    M = B * S

    # Row tile: large enough to feed the MXU, multiple of 8, never larger than
    # the (padded) row count.  Rows are zero-padded, so no divisibility assert.
    tm = min(tm_max, _round_up(M, 8))
    M_pad = _round_up(M, tm)

    # dff tile: bound the per-step working set (w1/w2 chunks + (tm, tk) f32
    # intermediate) -- needed for v7x's 64 MiB VMEM with large dff.
    if dff <= tk_max:
        tk = dff
    else:
        tk = dff
        for cand in (2048, 1024, 512, 256, 128):
            if cand <= tk_max and dff % cand == 0:
                tk = cand
                break
    n_k = dff // tk

    x2d = x.reshape(M, D)
    if M_pad != M:
        x2d = jnp.pad(x2d, ((0, M_pad - M), (0, 0)))
    b1_2d = b1.reshape(1, dff)
    b2_2d = b2.reshape(1, D)

    # Single-buffer operands whose block index never changes.
    const_w = pl.Buffered(1) if n_k == 1 else None

    # VMEM budget estimate (double-buffered streams + resident scratch).
    xb, wb, ob = x.dtype.itemsize, w1.dtype.itemsize, x.dtype.itemsize
    working = (2 * tm * D * xb            # x tiles
               + 2 * tm * D * ob          # out tiles
               + 2 * D * tk * wb          # w1 chunk
               + 2 * tk * D * wb          # w2 chunk
               + 2 * (tk + D) * 4         # biases (generous)
               + tm * D * 4               # f32 accumulator scratch
               + tm * tk * 4)             # f32 intermediate h
    vmem_limit = min(max(int(1.5 * working), 16 << 20), 64 << 20)

    flops = 4 * M * D * dff               # two matmuls, 2*M*D*dff each
    bytes_accessed = (M * D * xb + D * dff * wb + dff * wb
                      + dff * D * wb + D * wb + M * D * ob)

    out2d = pl.pallas_call(
        _residual_ff_kernel,
        out_shape=jax.ShapeDtypeStruct((M_pad, D), x.dtype),
        grid_spec=pltpu.PrefetchScalarGridSpec(
            num_scalar_prefetch=0,
            grid=(M_pad // tm, n_k),
            in_specs=[
                pl.BlockSpec((tm, D), lambda i, k: (i, 0)),                # x
                pl.BlockSpec((D, tk), lambda i, k: (0, k),
                             pipeline_mode=const_w),                      # w1
                pl.BlockSpec((1, tk), lambda i, k: (0, k),
                             pipeline_mode=const_w),                      # b1
                pl.BlockSpec((tk, D), lambda i, k: (k, 0),
                             pipeline_mode=const_w),                      # w2
                pl.BlockSpec((1, D), lambda i, k: (0, 0),
                             pipeline_mode=pl.Buffered(1)),               # b2
            ],
            out_specs=pl.BlockSpec((tm, D), lambda i, k: (i, 0)),
            scratch_shapes=[pltpu.VMEM((tm, D), jnp.float32)],
        ),
        compiler_params=pltpu.CompilerParams(
            dimension_semantics=("parallel", "arbitrary"),
            vmem_limit_bytes=vmem_limit,
        ),
        cost_estimate=pl.CostEstimate(
            flops=flops, transcendentals=0, bytes_accessed=bytes_accessed),
    )(x2d, w1, b1_2d, w2, b2_2d)

    return out2d[:M].reshape(B, S, D)


if __name__ == "__main__":
    # Small shapes consistent with a transformer FF residual block.
    B, S, D, DFF = 2, 8, 32, 64

    key = jax.random.PRNGKey(0)
    kx, k1, kb1, k2, kb2 = jax.random.split(key, 5)
    x = jax.random.normal(kx, (B, S, D), dtype=jnp.float32)
    w1 = jax.random.normal(k1, (D, DFF), dtype=jnp.float32) * 0.05
    b1 = jax.random.normal(kb1, (DFF,), dtype=jnp.float32) * 0.05
    w2 = jax.random.normal(k2, (DFF, D), dtype=jnp.float32) * 0.05
    b2 = jax.random.normal(kb2, (D,), dtype=jnp.float32) * 0.05

    out = residual_feedforward(x, w1, b1, w2, b2)
    out = jax.block_until_ready(out)

    # Pure-JAX reference for the same Residual(FeedForward) forward pass.
    ref = jnp.maximum(x @ w1 + b1, 0.0) @ w2 + b2 + x
    assert out.shape == x.shape
    assert jnp.allclose(out, ref, atol=1e-4, rtol=1e-4)

    print("KERNEL_OK")
</pallas_src>

<mosaic_0001>
module attributes {stable_mosaic.version = 11 : i64} {
  func.func @_residual_ff_kernel(%arg0: i32, %arg1: i32, %arg2: memref<16x32xf32, #tpu.memory_space<vmem>>, %arg3: memref<32x64xf32, #tpu.memory_space<vmem>>, %arg4: memref<1x64xf32, #tpu.memory_space<vmem>>, %arg5: memref<64x32xf32, #tpu.memory_space<vmem>>, %arg6: memref<1x32xf32, #tpu.memory_space<vmem>>, %arg7: memref<16x32xf32, #tpu.memory_space<vmem>>, %arg8: memref<16x32xf32, #tpu.memory_space<vmem>>) attributes {dimension_semantics = [#tpu.dimension_semantics<parallel>, #tpu.dimension_semantics<arbitrary>], iteration_bounds = array<i64: 1, 1>, scalar_prefetch = 0 : i64, scratch_operands = 1 : i64, tpu.core_type = #tpu.core_type<tc>, window_params = [{transform_indices = @transform_0, window_bounds = array<i64: 16, 32>}, {pipeline_mode = #tpu.pipeline_mode<synchronous>, transform_indices = @transform_1, window_bounds = array<i64: 32, 64>}, {pipeline_mode = #tpu.pipeline_mode<synchronous>, transform_indices = @transform_2, window_bounds = array<i64: 1, 64>}, {pipeline_mode = #tpu.pipeline_mode<synchronous>, transform_indices = @transform_3, window_bounds = array<i64: 64, 32>}, {pipeline_mode = #tpu.pipeline_mode<synchronous>, transform_indices = @transform_4, window_bounds = array<i64: 1, 32>}, {transform_indices = @transform_5, window_bounds = array<i64: 16, 32>}]} {
    %c0_i32 = arith.constant 0 : i32
    %0 = arith.cmpi eq, %arg1, %c0_i32 : i32
    %1 = arith.extui %0 : i1 to i32
    %c0_i32_0 = arith.constant 0 : i32
    %2 = arith.cmpi ne, %1, %c0_i32_0 : i32
    scf.if %2 {
      %c0_16 = arith.constant 0 : index
      %c0_17 = arith.constant 0 : index
      %19 = vector.load %arg2[%c0_16, %c0_17] : memref<16x32xf32, #tpu.memory_space<vmem>>, vector<16x32xf32>
      %c0_18 = arith.constant 0 : index
      %c0_19 = arith.constant 0 : index
      %20 = vector.load %arg6[%c0_18, %c0_19] : memref<1x32xf32, #tpu.memory_space<vmem>>, vector<1x32xf32>
      %21 = vector.broadcast %20 : vector<1x32xf32> to vector<16x32xf32>
      %22 = arith.addf %19, %21 : vector<16x32xf32>
      %c0_20 = arith.constant 0 : index
      %c0_21 = arith.constant 0 : index
      %23 = vector.load %arg8[%c0_20, %c0_21] : memref<16x32xf32, #tpu.memory_space<vmem>>, vector<16x32xf32>
      tpu.vector_store %arg8[%c0_20, %c0_21], %22 {strides = array<i32>} : memref<16x32xf32, #tpu.memory_space<vmem>>, vector<16x32xf32>,
    } else {
    }
    %c0 = arith.constant 0 : index
    %c0_1 = arith.constant 0 : index
    %3 = vector.load %arg2[%c0, %c0_1] : memref<16x32xf32, #tpu.memory_space<vmem>>, vector<16x32xf32>
    %c0_2 = arith.constant 0 : index
    %c0_3 = arith.constant 0 : index
    %4 = vector.load %arg3[%c0_2, %c0_3] : memref<32x64xf32, #tpu.memory_space<vmem>>, vector<32x64xf32>
    %cst = arith.constant dense<0.000000e+00> : vector<16x64xf32>
    %5 = tpu.matmul %3, %4, %cst {dimension_numbers = #tpu.dot_dimension_numbers<[1], [0], [0], [1], [0, 0, 1, 1], [], []>} : vector<16x32xf32>, vector<32x64xf32>, vector<16x64xf32> -> vector<16x64xf32>
    %c0_4 = arith.constant 0 : index
    %c0_5 = arith.constant 0 : index
    %6 = vector.load %arg4[%c0_4, %c0_5] : memref<1x64xf32, #tpu.memory_space<vmem>>, vector<1x64xf32>
    %7 = vector.broadcast %6 : vector<1x64xf32> to vector<16x64xf32>
    %8 = arith.addf %5, %7 : vector<16x64xf32>
    %cst_6 = arith.constant 0.000000e+00 : f32
    %9 = vector.broadcast %cst_6 : f32 to vector<16x64xf32>
    %10 = arith.maximumf %8, %9 : vector<16x64xf32>
    %c0_7 = arith.constant 0 : index
    %c0_8 = arith.constant 0 : index
    %11 = vector.load %arg8[%c0_7, %c0_8] : memref<16x32xf32, #tpu.memory_space<vmem>>, vector<16x32xf32>
    %c0_9 = arith.constant 0 : index
    %c0_10 = arith.constant 0 : index
    %12 = vector.load %arg5[%c0_9, %c0_10] : memref<64x32xf32, #tpu.memory_space<vmem>>, vector<64x32xf32>
    %cst_11 = arith.constant dense<0.000000e+00> : vector<16x32xf32>
    %13 = tpu.matmul %10, %12, %cst_11 {dimension_numbers = #tpu.dot_dimension_numbers<[1], [0], [0], [1], [0, 0, 1, 1], [], []>} : vector<16x64xf32>, vector<64x32xf32>, vector<16x32xf32> -> vector<16x32xf32>
    %14 = arith.addf %11, %13 : vector<16x32xf32>
    %c0_12 = arith.constant 0 : index
    %c0_13 = arith.constant 0 : index
    %15 = vector.load %arg8[%c0_12, %c0_13] : memref<16x32xf32, #tpu.memory_space<vmem>>, vector<16x32xf32>
    tpu.vector_store %arg8[%c0_12, %c0_13], %14 {strides = array<i32>} : memref<16x32xf32, #tpu.memory_space<vmem>>, vector<16x32xf32>,
    %c0_i32_14 = arith.constant 0 : i32
    %16 = arith.cmpi eq, %arg1, %c0_i32_14 : i32
    %17 = arith.extui %16 : i1 to i32
    %c0_i32_15 = arith.constant 0 : i32
    %18 = arith.cmpi ne, %17, %c0_i32_15 : i32
    scf.if %18 {
      %c0_16 = arith.constant 0 : index
      %c0_17 = arith.constant 0 : index
      %19 = vector.load %arg8[%c0_16, %c0_17] : memref<16x32xf32, #tpu.memory_space<vmem>>, vector<16x32xf32>
      %c0_18 = arith.constant 0 : index
      %c0_19 = arith.constant 0 : index
      %20 = vector.load %arg7[%c0_18, %c0_19] : memref<16x32xf32, #tpu.memory_space<vmem>>, vector<16x32xf32>
      tpu.vector_store %arg7[%c0_18, %c0_19], %19 {strides = array<i32>} : memref<16x32xf32, #tpu.memory_space<vmem>>, vector<16x32xf32>,
    } else {
    }
    return
  }
  func.func @transform_0(%arg0: i32, %arg1: i32) -> (i32, i32) {
    %c0_i32 = arith.constant 0 : i32
    %c0_i32_0 = arith.constant 0 : i32
    return %arg0, %c0_i32 : i32, i32
  }
  func.func @transform_1(%arg0: i32, %arg1: i32) -> (i32, i32) {
    %c0_i32 = arith.constant 0 : i32
    %c0_i32_0 = arith.constant 0 : i32
    return %c0_i32, %arg1 : i32, i32
  }
  func.func @transform_2(%arg0: i32, %arg1: i32) -> (i32, i32) {
    %c0_i32 = arith.constant 0 : i32
    %c0_i32_0 = arith.constant 0 : i32
    return %c0_i32, %arg1 : i32, i32
  }
  func.func @transform_3(%arg0: i32, %arg1: i32) -> (i32, i32) {
    %c0_i32 = arith.constant 0 : i32
    %c0_i32_0 = arith.constant 0 : i32
    return %arg1, %c0_i32 : i32, i32
  }
  func.func @transform_4(%arg0: i32, %arg1: i32) -> (i32, i32) {
    %c0_i32 = arith.constant 0 : i32
    %c0_i32_0 = arith.constant 0 : i32
    %c0_i32_1 = arith.constant 0 : i32
    return %c0_i32, %c0_i32_0 : i32, i32
  }
  func.func @transform_5(%arg0: i32, %arg1: i32) -> (i32, i32) {
    %c0_i32 = arith.constant 0 : i32
    %c0_i32_0 = arith.constant 0 : i32
    return %arg0, %c0_i32 : i32, i32
  }
}

</mosaic_0001>

<llo_original>
// kernel: tpu_custom_call.1
$region0: #{tpu_custom_call.1}
  #allocation0 [shape = 'u32[]', space=smem, size = 0x4, offset = 0x4, fixed_abs, tag = 'smem constant byte address 0x4 - core index']
  #allocation1 [shape = 'u32[144,128]{1,0:T(1,128)}', space=vmem, size = 0x12000, scoped, tag = 'internal scratch']
  #allocation2 [shape = 'f32[16,32]{1,0:T(8,128)}', space=vmem, size = 0x2000, scoped, tag = 'scratch operand']
  %s0 = inlined_call_operand.vmem [shape: f32[16,32], index: 0, kind: input, shape index: {}]
  %s1 = inlined_call_operand.vmem [shape: f32[32,64], index: 1, kind: input, shape index: {}]
  %s2 = inlined_call_operand.vmem [shape: f32[1,64], index: 2, kind: input, shape index: {}]
  %s3 = inlined_call_operand.vmem [shape: f32[64,32], index: 3, kind: input, shape index: {}]
  %s4 = inlined_call_operand.vmem [shape: f32[1,32], index: 4, kind: input, shape index: {}]
  %s5 = inlined_call_operand.hbm [shape: f32[16,32], index: 5, kind: output, shape index: {}]
  %s6 = sld [smem:[#allocation0]]
  $region38: #{tpu_custom_call.1} parent=0
    _
  %s8 = ssub.s32 1, %s6
  %s9 = scalar_select 0, %s8, %s6
  $region1: #{tpu_custom_call.1} parent=0
    #allocation3 [shape = 'u8[8192]{0}', space=vmem, size = 0x2000, scoped, tag = 'output window, operand 0, single buffered']
    #allocation4 [shape = 's32[1]{0}', space=sflag, size = 0x4, scoped, tag = 'scoped memory for tpu_custom_call.1']
    %10 = vsyncpa [#allocation4], 0
    // Predicated region
    $region2: #{tpu_custom_call.1} parent=1 // pred_check
      _
    $region3: #{tpu_custom_call.1} parent=1 // pred_check_branch
      %12 = sbr.rel (0) target = $region5
    $region4: #{tpu_custom_call.1} parent=1 // pred_region
      _
    $region5: #{tpu_custom_call.1} parent=1 // pred_fallthru
      _
    // Predicated region
    $region6: #{tpu_custom_call.1} parent=1 // pred_check
      _
    $region7: #{tpu_custom_call.1} parent=1 // pred_check_branch
      %14 = sbr.rel (0) target = $region9
    $region8: #{tpu_custom_call.1} parent=1 // pred_region
      _
    $region9: #{tpu_custom_call.1} parent=1 // pred_fallthru
      _
    // Predicated region
    $region10: #{tpu_custom_call.1} parent=1 // pred_check
      _
    $region11: #{tpu_custom_call.1} parent=1 // pred_check_branch
      %16 = sbr.rel (0) target = $region13
    $region12: #{tpu_custom_call.1} parent=1 // pred_region
      _
    $region13: #{tpu_custom_call.1} parent=1 // pred_fallthru
      _
    // Predicated region
    $region14: #{tpu_custom_call.1} parent=1 // pred_check
      _
    $region15: #{tpu_custom_call.1} parent=1 // pred_check_branch
      %18 = sbr.rel (0) target = $region17
    $region16: #{tpu_custom_call.1} parent=1 // pred_region
      _
    $region17: #{tpu_custom_call.1} parent=1 // pred_fallthru
      _
    // Predicated region
    $region18: #{tpu_custom_call.1} parent=1 // pred_check
      _
    $region19: #{tpu_custom_call.1} parent=1 // pred_check_branch
      %20 = sbr.rel (0) target = $region21
    $region20: #{tpu_custom_call.1} parent=1 // pred_region
      _
    $region21: #{tpu_custom_call.1} parent=1 // pred_fallthru
      _
    %p21 = scmp.eq.s32.totalorder 0, 0
    // Predicated region
    $region22: #{tpu_custom_call.1} parent=1 // pred_check
      %p22 = pneg %p21
    $region23: #{tpu_custom_call.1} parent=1 // pred_check_branch
      %24 = sbr.rel (%p22) target = $region25
    $region24: #{tpu_custom_call.1} parent=1 // pred_region
      %v25 = vld [vmem:[%s0] sm:$0xff]
      %v26 = vld [vmem:[%s0 + $0x8] sm:$0xff]
      %v27 = vld [vmem:[%s4] sm:$0x1]
      %v29 = vlaneseq
      %v30 = vshrl.u32 %v29, 7
      %v31 = vsub.s32 0, %v30
      %v32 = vrot.slane %v27, %v31
      %v34 = vadd.f32 %v25, %v32
      %v35 = vadd.f32 %v26, %v32
      %vm36 = vcmask 261120
      %37 = vst.msk [vmem:[#allocation2] sm:$0xff] %vm36, %v34
      %38 = vst.msk [vmem:[#allocation2 + $0x8] sm:$0xff] %vm36, %v35
    $region25: #{tpu_custom_call.1} parent=1 // pred_fallthru
      _
    %v39 = vld [vmem:[%s0] sm:$0xff]
    %v40 = vld [vmem:[%s0 + $0x8] sm:$0xff]
    %v41 = vld [vmem:[%s1] sm:$0xff]
    %v42 = vld [vmem:[%s1 + $0x8] sm:$0xff]
    %v43 = vld [vmem:[%s1 + $0x10] sm:$0xff]
    %v44 = vld [vmem:[%s1 + $0x18] sm:$0xff]
    %v45 = vld [vmem:[%s2] sm:$0x1]
    %v47 = vlaneseq
    %v48 = vshrl.u32 %v47, 7
    %v49 = vsub.s32 0, %v48
    %v50 = vrot.slane %v45, %v49
    %vm52 = vcmask 261120
    %v54 = vsel %vm52, %v39, 0
    %v57 = vsel %vm52, %v40, 0
    %59 = vmatprep.subr.mxu0 0.0
    %60 = vmatpush1.msra.mxu0 0.0
    %61 = vmatprep.subr.mxu0 0.0
    %62 = vmatpush1.msra.mxu0 0.0
    %63 = vmatprep.subr.mxu0 0.0
    %64 = vmatpush1.msra.mxu0 0.0
    %65 = vmatprep.subr.mxu0 0.0
    %66 = vmatpush1.msra.mxu0 0.0
    %67 = vmatprep.subr.mxu0 0.0
    %68 = vmatpush1.msra.mxu0 0.0
    %69 = vmatprep.subr.mxu0 0.0
    %70 = vmatpush1.msra.mxu0 0.0
    %71 = vmatprep.subr.mxu0 0.0
    %72 = vmatpush1.msra.mxu0 0.0
    %73 = vmatprep.subr.mxu0 0.0
    %74 = vmatpush1.msra.mxu0 0.0
    %75 = vmatprep.subr.mxu0 0.0
    %76 = vmatpush1.msra.mxu0 0.0
    %77 = vmatprep.subr.mxu0 0.0
    %78 = vmatpush1.msra.mxu0 0.0
    %79 = vmatprep.subr.mxu0 0.0
    %80 = vmatpush1.msra.mxu0 0.0
    %81 = vmatprep.subr.mxu0 0.0
    %82 = vmatpush1.msra.mxu0 0.0
    %83 = vmatprep.subr.mxu0 0.0
    %84 = vmatpush1.msra.mxu0 %v44
    %85 = vmatprep.subr.mxu0 0.0
    %86 = vmatpush1.msra.mxu0 %v43
    %87 = vmatprep.subr.mxu0 0.0
    %88 = vmatpush1.msra.mxu0 %v42
    %89 = vmatprep.subr.mxu0 0.0
    %90 = vmatpush1.msra.mxu0 %v41
    %91 = vmatprep.subr.mxu0 0.0
    %92 = vmatpush2.msra.mxu0 0.0
    %93 = vmatprep.subr.mxu0 0.0
    %94 = vmatpush2.msra.mxu0 0.0
    %95 = vmatprep.subr.mxu0 0.0
    %96 = vmatpush2.msra.mxu0 0.0
    %97 = vmatprep.subr.mxu0 0.0
    %98 = vmatpush2.msra.mxu0 0.0
    %99 = vmatprep.subr.mxu0 0.0
    %100 = vmatpush2.msra.mxu0 0.0
    %101 = vmatprep.subr.mxu0 0.0
    %102 = vmatpush2.msra.mxu0 0.0
    %103 = vmatprep.subr.mxu0 0.0
    %104 = vmatpush2.msra.mxu0 0.0
    %105 = vmatprep.subr.mxu0 0.0
    %106 = vmatpush2.msra.mxu0 0.0
    %107 = vmatprep.subr.mxu0 0.0
    %108 = vmatpush2.msra.mxu0 0.0
    %109 = vmatprep.subr.mxu0 0.0
    %110 = vmatpush2.msra.mxu0 0.0
    %111 = vmatprep.subr.mxu0 0.0
    %112 = vmatpush2.msra.mxu0 0.0
    %113 = vmatprep.subr.mxu0 0.0
    %114 = vmatpush2.msra.mxu0 0.0
    %115 = vmatprep.subr.mxu0 0.0
    %116 = vmatpush2.msra.mxu0 0.0
    %117 = vmatprep.subr.mxu0 0.0
    %118 = vmatpush2.msra.mxu0 0.0
    %119 = vmatprep.subr.mxu0 0.0
    %120 = vmatpush2.msra.mxu0 0.0
    %121 = vmatprep.subr.mxu0 0.0
    %122 = vmatpush2.msra.mxu0 0.0
    %123 = vmatprep.mubr.f32.mxu0 0.0
    %124 = vmatmul.mubr.f32.gmra.mxu0 %v54
    %v125 = vpop.f32.mrf.mxu0
    %v126 = vadd.f32 %v50, %v125
    %v127 = vpop.f32.mrf.mxu0
    %128 = vmatprep.mubr.f32.mxu0 0.0
    %129 = vmatmul.mubr.f32.gmra.mxu0 %v57
    %v130 = vpop.f32.mrf.mxu0
    %v131 = vadd.f32 %v50, %v130
    %v132 = vpop.f32.mrf.mxu0
    %133 = vdwg.mxu0
    %v134 = vmax.f32 %v126, 0.0
    %v135 = vmax.f32 %v131, 0.0
    %v136 = vld [vmem:[#allocation2] sm:$0xff]
    %v137 = vld [vmem:[#allocation2 + $0x8] sm:$0xff]
    %v138 = vld [vmem:[%s3] sm:$0xff]
    %v139 = vld [vmem:[%s3 + $0x8] sm:$0xff]
    %v140 = vld [vmem:[%s3 + $0x10] sm:$0xff]
    %v141 = vld [vmem:[%s3 + $0x18] sm:$0xff]
    %v142 = vld [vmem:[%s3 + $0x20] sm:$0xff]
    %v143 = vld [vmem:[%s3 + $0x28] sm:$0xff]
    %v144 = vld [vmem:[%s3 + $0x30] sm:$0xff]
    %v145 = vld [vmem:[%s3 + $0x38] sm:$0xff]
    %vm146 = vcmask 523264
    %v148 = vsel %vm146, %v134, 0
    %v151 = vsel %vm146, %v135, 0
    %153 = vmatprep.subr.mxu0 0.0
    %154 = vmatpush1.msra.mxu0 0.0
    %155 = vmatprep.subr.mxu0 0.0
    %156 = vmatpush1.msra.mxu0 0.0
    %157 = vmatprep.subr.mxu0 0.0
    %158 = vmatpush1.msra.mxu0 0.0
    %159 = vmatprep.subr.mxu0 0.0
    %160 = vmatpush1.msra.mxu0 0.0
    %161 = vmatprep.subr.mxu0 0.0
    %162 = vmatpush1.msra.mxu0 0.0
    %163 = vmatprep.subr.mxu0 0.0
    %164 = vmatpush1.msra.mxu0 0.0
    %165 = vmatprep.subr.mxu0 0.0
    %166 = vmatpush1.msra.mxu0 0.0
    %167 = vmatprep.subr.mxu0 0.0
    %168 = vmatpush1.msra.mxu0 0.0
    %169 = vmatprep.subr.mxu0 0.0
    %170 = vmatpush1.msra.mxu0 %v145
    %171 = vmatprep.subr.mxu0 0.0
    %172 = vmatpush1.msra.mxu0 %v144
    %173 = vmatprep.subr.mxu0 0.0
    %174 = vmatpush1.msra.mxu0 %v143
    %175 = vmatprep.subr.mxu0 0.0
    %176 = vmatpush1.msra.mxu0 %v142
    %177 = vmatprep.subr.mxu0 0.0
    %178 = vmatpush1.msra.mxu0 %v141
    %179 = vmatprep.subr.mxu0 0.0
    %180 = vmatpush1.msra.mxu0 %v140
    %181 = vmatprep.subr.mxu0 0.0
    %182 = vmatpush1.msra.mxu0 %v139
    %183 = vmatprep.subr.mxu0 0.0
    %184 = vmatpush1.msra.mxu0 %v138
    %185 = vmatprep.subr.mxu0 0.0
    %186 = vmatpush2.msra.mxu0 0.0
    %187 = vmatprep.subr.mxu0 0.0
    %188 = vmatpush2.msra.mxu0 0.0
    %189 = vmatprep.subr.mxu0 0.0
    %190 = vmatpush2.msra.mxu0 0.0
    %191 = vmatprep.subr.mxu0 0.0
    %192 = vmatpush2.msra.mxu0 0.0
    %193 = vmatprep.subr.mxu0 0.0
    %194 = vmatpush2.msra.mxu0 0.0
    %195 = vmatprep.subr.mxu0 0.0
    %196 = vmatpush2.msra.mxu0 0.0
    %197 = vmatprep.subr.mxu0 0.0
    %198 = vmatpush2.msra.mxu0 0.0
    %199 = vmatprep.subr.mxu0 0.0
    %200 = vmatpush2.msra.mxu0 0.0
    %201 = vmatprep.subr.mxu0 0.0
    %202 = vmatpush2.msra.mxu0 0.0
    %203 = vmatprep.subr.mxu0 0.0
    %204 = vmatpush2.msra.mxu0 0.0
    %205 = vmatprep.subr.mxu0 0.0
    %206 = vmatpush2.msra.mxu0 0.0
    %207 = vmatprep.subr.mxu0 0.0
    %208 = vmatpush2.msra.mxu0 0.0
    %209 = vmatprep.subr.mxu0 0.0
    %210 = vmatpush2.msra.mxu0 0.0
    %211 = vmatprep.subr.mxu0 0.0
    %212 = vmatpush2.msra.mxu0 0.0
    %213 = vmatprep.subr.mxu0 0.0
    %214 = vmatpush2.msra.mxu0 0.0
    %215 = vmatprep.subr.mxu0 0.0
    %216 = vmatpush2.msra.mxu0 0.0
    %217 = vmatprep.mubr.f32.mxu0 0.0
    %218 = vmatmul.mubr.f32.gmra.mxu0 %v148
    %v219 = vpop.f32.mrf.mxu0
    %v220 = vadd.f32 0.0, %v219
    %v221 = vpop.f32.mrf.mxu0
    %222 = vmatprep.mubr.f32.mxu0 0.0
    %223 = vmatmul.mubr.f32.gmra.mxu0 %v151
    %v224 = vpop.f32.mrf.mxu0
    %v225 = vadd.f32 0.0, %v224
    %v226 = vpop.f32.mrf.mxu0
    %227 = vdwg.mxu0
    %v228 = vadd.f32 %v136, %v220
    %v229 = vadd.f32 %v137, %v225
    %230 = vst.msk [vmem:[#allocation2] sm:$0xff] %vm52, %v228
    %231 = vst.msk [vmem:[#allocation2 + $0x8] sm:$0xff] %vm52, %v229
    // Predicated region
    $region26: #{tpu_custom_call.1} parent=1 // pred_check
      %p232 = pneg %p21
    $region27: #{tpu_custom_call.1} parent=1 // pred_check_branch
      %234 = sbr.rel (%p232) target = $region29
    $region28: #{tpu_custom_call.1} parent=1 // pred_region
      %v235 = vld [vmem:[#allocation2] sm:$0xff]
      %v236 = vld [vmem:[#allocation2 + $0x8] sm:$0xff]
      %237 = vst.msk [vmem:[#allocation3] sm:$0xff] %vm52, %v235
      %238 = vst.msk [vmem:[#allocation3 + $0x8] sm:$0xff] %vm52, %v236
    $region29: #{tpu_custom_call.1} parent=1 // pred_fallthru
      _
    // Predicated region
    $region30: #{tpu_custom_call.1} parent=1 // pred_check
      _
    $region31: #{tpu_custom_call.1} parent=1 // pred_check_branch
      %240 = sbr.rel (0) target = $region33
    $region32: #{tpu_custom_call.1} parent=1 // pred_region
      %s242 = ssub.s32 256, 256
      %243 = vsyncadd [#allocation4], %s242
      %s244 = sshll.u32 [#allocation3], 4
      %s245 = int_to_ptr.vmem [resolvable:$true] %s244
      %250 = dma.vmem_to_hbm [thread:$0]  %s245, 256, %s5, [#allocation4], 128, 128, 8
    $region33: #{tpu_custom_call.1} parent=1 // pred_fallthru
      _
    // Predicated region
    $region34: #{tpu_custom_call.1} parent=1 // pred_check
      _
    $region35: #{tpu_custom_call.1} parent=1 // pred_check_branch
      %252 = sbr.rel (0) target = $region37
    $region36: #{tpu_custom_call.1} parent=1 // pred_region
      %253 = dma.done [#allocation4], 256
    $region37: #{tpu_custom_call.1} parent=1 // pred_fallthru
      _
    %254 = vsyncpa [#allocation4], 1

</llo_original>
